<compile_context>
chip_gen: v7x
topology: tpu7x:2x2x1
jax: 0.10.0
libtpu: 0.0.40
codegen_flags: <defaults>
</compile_context>

<pallas_src>
import functools

import jax
import jax.numpy as jnp
from jax.experimental import pallas as pl
from jax.experimental.pallas import tpu as pltpu


LANES = 128  # lane-dense padding target for the label dimension (keep at 128)


# ---------------------------------------------------------------------------
# Kernels
# ---------------------------------------------------------------------------

def clf_logits_kernel(cls_ref, w_ref, b_ref, logits_ref):
    """Inference-path tile: logits only (no labels DMA, no loss output).

    cls_ref    : [TB, H]  bf16   token-0 hidden states for this batch tile
    w_ref      : [H, Lp]  bf16   classifier weight (pre-transposed, lane-padded)
    b_ref      : [1, Lp]  f32    classifier bias (-1e30 baked into padded lanes)
    logits_ref : [TB, Lp] f32    lane-dense logits store
    """
    # TODO(synk): nn.Dropout(0.1) is identity in eval mode; a training-mode
    # version would mask with pltpu.prng_random_bits here.
    logits_ref[...] = (
        jnp.dot(cls_ref[...], w_ref[...], preferred_element_type=jnp.float32)
        + b_ref[...])


def clf_logits_loss_kernel(cls_ref, labels_ref, w_ref, b_ref,
                           logits_ref, loss_ref, *, batch):
    """Training-path tile: logits + per-tile cross-entropy partials.

    labels_ref : [TB, 1]   int32  labels (-100 == ignore_index)
    loss_ref   : [8, Lp]   f32    only row 0 is written:
                                  lane 0 = partial CE sum, lane 1 = valid count
    """
    i = pl.program_id(0)
    tb, lp = logits_ref.shape

    # bf16 x bf16 -> f32 accumulate: the MXU's native fast path on v5e/v6e/v7x.
    logits = (jnp.dot(cls_ref[...], w_ref[...], preferred_element_type=jnp.float32)
              + b_ref[...])
    logits_ref[...] = logits  # lane-dense [TB, 128] f32 store

    # Cross-entropy partials.  Rows past the true batch (ragged final tile) and
    # rows whose label is ignore_index (-100) are masked out of sum and count.
    labels = labels_ref[...]
    row = jax.lax.broadcasted_iota(jnp.int32, (tb, 1), 0) + i * tb
    valid = (row < batch) & (labels != -100)

    m = jnp.max(logits, axis=-1, keepdims=True)
    lse = jnp.log(jnp.sum(jnp.exp(logits - m), axis=-1, keepdims=True)) + m
    col = jax.lax.broadcasted_iota(jnp.int32, (tb, lp), 1)   # in-kernel one-hot
    tgt = jnp.sum(jnp.where(col == labels, logits, 0.0), axis=-1, keepdims=True)
    per_row = jnp.where(valid, lse - tgt, 0.0)

    part_sum = jnp.sum(per_row)
    part_cnt = jnp.sum(jnp.where(valid, 1.0, 0.0))

    # Single masked (1, 128) row store instead of a broadcast-filled (8, 128) tile.
    lane = jax.lax.broadcasted_iota(jnp.int32, (1, lp), 1)
    loss_ref[0:1, :] = jnp.where(lane == 0, part_sum,
                                 jnp.where(lane == 1, part_cnt, 0.0))


# ---------------------------------------------------------------------------
# One-time parameter prep (outside the per-call forward path)
# ---------------------------------------------------------------------------

def prepare_classifier_params(w, b, num_labels):
    """w: [L, H] f32 (nn.Linear layout), b: [L] f32.

    Returns w_pad [H, Lp] bf16 (transposed + lane-padded with zeros) and
    b_pad [1, Lp] f32 with -1e30 baked into the padded lanes, so padded logits
    columns never affect max / logsumexp and no in-kernel mask is needed.
    """
    L, H = w.shape
    lp = max(LANES, pl.cdiv(num_labels, LANES) * LANES)
    w_pad = jnp.zeros((H, lp), jnp.bfloat16).at[:, :L].set(
        jnp.asarray(w, jnp.bfloat16).T)
    b_pad = jnp.full((1, lp), -1e30, jnp.float32).at[0, :L].set(
        jnp.asarray(b, jnp.float32))
    return w_pad, b_pad


# ---------------------------------------------------------------------------
# VMEM budgeting & batch-tile selection
# ---------------------------------------------------------------------------

def _vmem_capacity_bytes():
    try:
        return int(pltpu.get_tpu_info().vmem_capacity_bytes)
    except Exception:
        return 64 * 2 ** 20   # conservative default: v7x per-TC VMEM


def _vmem_budgets():
    cap = _vmem_capacity_bytes()
    # Explicit scoped-VMEM limit (review: don't rely on the 32 MiB default):
    # v7x (64 MiB physical) -> ~56 MiB limit / ~45 MiB tile budget,
    # v5e/v6e (128 MiB)     -> ~112 MiB limit / ~90 MiB tile budget.
    vmem_limit = min(cap * 7 // 8, 112 * 2 ** 20)
    tile_budget = vmem_limit * 4 // 5
    return vmem_limit, tile_budget


def _pick_batch_tile(batch, per_row_bytes, fixed_bytes, budget_bytes):
    """Largest sublane-aligned batch tile that fits the VMEM budget.

    No divisibility requirement on the batch: the grid uses pl.cdiv and the
    kernel masks ragged rows.  Tiny batches (< 8) use a full-dim block.
    """
    if batch < 8:
        return batch
    for tb in (1024, 512, 256, 128, 64, 32, 16, 8):
        if tb <= batch and fixed_bytes + tb * per_row_bytes <= budget_bytes:
            return tb
    return 8


# ---------------------------------------------------------------------------
# pallas_call builder
# ---------------------------------------------------------------------------

def _head_call(x, labels2d, w_pad, b_pad, *, batch, hidden, tile, fused,
               buffered_resident, compute_loss, vmem_limit_bytes):
    lanes = w_pad.shape[1]
    n_tiles = pl.cdiv(batch, tile)

    if fused:
        # CLS selection fused into the BlockSpec: seq dim squeezed and pinned to
        # token 0, so only token-0 rows are ever DMA'd from HBM.
        x_spec = pl.BlockSpec((tile, None, hidden), lambda i: (i, 0, 0))
    else:
        x_spec = pl.BlockSpec((tile, hidden), lambda i: (i, 0))

    if buffered_resident:
        # Resident weight/bias: constant index_map -> single-buffer to save VMEM.
        w_spec = pl.BlockSpec((hidden, lanes), lambda i: (0, 0),
                              pipeline_mode=pl.Buffered(1))
        b_spec = pl.BlockSpec((1, lanes), lambda i: (0, 0),
                              pipeline_mode=pl.Buffered(1))
    else:
        w_spec = pl.BlockSpec((hidden, lanes), lambda i: (0, 0))
        b_spec = pl.BlockSpec((1, lanes), lambda i: (0, 0))

    logits_spec = pl.BlockSpec((tile, lanes), lambda i: (i, 0))
    logits_shape = jax.ShapeDtypeStruct((batch, lanes), jnp.float32)
    cparams = pltpu.CompilerParams(
        dimension_semantics=("parallel",),
        vmem_limit_bytes=int(vmem_limit_bytes))

    if not compute_loss:
        return pl.pallas_call(
            clf_logits_kernel,
            grid=(n_tiles,),
            in_specs=[x_spec, w_spec, b_spec],
            out_specs=logits_spec,
            out_shape=logits_shape,
            compiler_params=cparams,
        )(x, w_pad, b_pad)

    kernel = functools.partial(clf_logits_loss_kernel, batch=batch)
    return pl.pallas_call(
        kernel,
        grid=(n_tiles,),
        in_specs=[
            x_spec,
            pl.BlockSpec((tile, 1), lambda i: (i, 0)),     # labels column
            w_spec,
            b_spec,
        ],
        out_specs=(
            logits_spec,
            # One aligned (8, 128) f32 tile per grid step; only row 0 is written
            # (lane 0 = partial CE sum, lane 1 = valid-label count).
            pl.BlockSpec((None, 8, lanes), lambda i: (i, 0, 0)),
        ),
        out_shape=(
            logits_shape,
            jax.ShapeDtypeStruct((n_tiles, 8, lanes), jnp.float32),
        ),
        compiler_params=cparams,
    )(x, labels2d, w_pad, b_pad)


# ---------------------------------------------------------------------------
# One-time capability probe (deterministic path selection; replaces the old
# latching try/except on the real call).
# ---------------------------------------------------------------------------

_CAPS = {}


def _resolve_capabilities():
    if _CAPS:
        return _CAPS

    # Tiny deterministic shapes; the probes also verify numerics (the fused
    # probe checks the token-0 gather really reads token 0).
    B, S, H, L = 8, 4, 128, 6
    hs = jax.random.normal(jax.random.PRNGKey(1), (B, S, H),
                           jnp.float32).astype(jnp.bfloat16)
    w_probe = jnp.zeros((L, H), jnp.float32).at[jnp.arange(L),
                                                jnp.arange(L)].set(1.0)
    b_probe = jnp.zeros((L,), jnp.float32)
    w_pad, b_pad = prepare_classifier_params(w_probe, b_probe, L)
    labels2d = jnp.zeros((B, 1), jnp.int32)
    expect = hs[:, 0, :L].astype(jnp.float32)

    def _try(fused, buffered):
        try:
            x = hs if fused else hs[:, 0, :]
            logits_pad, _ = _head_call(
                x, labels2d, w_pad, b_pad, batch=B, hidden=H, tile=B,
                fused=fused, buffered_resident=buffered, compute_loss=True,
                vmem_limit_bytes=32 * 2 ** 20)
            return bool(jnp.allclose(logits_pad[:, :L], expect,
                                     atol=1e-5, rtol=1e-5))
        except Exception:
            return False

    _CAPS["fused_cls"] = _try(True, False)
    _CAPS["buffered_resident"] = _try(False, True)
    return _CAPS


# ---------------------------------------------------------------------------
# Forward wrapper (mirrors CustomModel.forward on top of backbone hidden states)
# ---------------------------------------------------------------------------

def custom_model_head(hidden_states, attention_mask, labels, w_pad, b_pad,
                      num_labels):
    """hidden_states : [B, S, H] bf16  -- stands in for outputs.hidden_states[-1]
    attention_mask: [B, S]          -- consumed by the backbone only
    labels        : [B] int or None (-100 entries are ignored, as in PyTorch)
    w_pad, b_pad  : outputs of prepare_classifier_params (one-time setup)
    """
    del attention_mask  # backbone-only; the head ignores it
    B, S, H = hidden_states.shape
    lanes = w_pad.shape[1]
    compute_loss = labels is not None
    caps = _resolve_capabilities()

    vmem_limit, tile_budget = _vmem_budgets()
    resident_bufs = 1 if caps["buffered_resident"] else 2
    fixed_bytes = resident_bufs * H * lanes * 2 + (2 << 20)   # weight + slack
    per_row_bytes = (2 * 2 * H                                # CLS bf16, x2 bufs
                     + 2 * 4 * lanes                          # logits f32, x2 bufs
                     + (2 * 4 * 128 if compute_loss else 0))  # labels (lane-padded)
    tile = _pick_batch_tile(B, per_row_bytes, fixed_bytes, tile_budget)

    if caps["fused_cls"]:
        x = hidden_states
    else:
        # TODO(synk): contiguous fallback costs one extra [B, H] HBM round trip;
        # used only if the fused token-0 BlockSpec is rejected/incorrect here.
        x = hidden_states[:, 0, :]

    labels2d = (jnp.asarray(labels, jnp.int32).reshape(B, 1)
                if compute_loss else None)

    out = _head_call(x, labels2d, w_pad, b_pad, batch=B, hidden=H, tile=tile,
                     fused=caps["fused_cls"],
                     buffered_resident=caps["buffered_resident"],
                     compute_loss=compute_loss,
                     vmem_limit_bytes=vmem_limit)

    if not compute_loss:
        return None, out[:, :num_labels]

    logits_pad, loss_parts = out
    logits = logits_pad[:, :num_labels]
    total = jnp.sum(loss_parts[:, 0, 0])
    count = jnp.sum(loss_parts[:, 0, 1])
    # Mean over non-ignored labels (NaN if all labels are -100, as in PyTorch).
    loss = total / count
    return loss, logits


# ---------------------------------------------------------------------------
# Demo / self-test
# ---------------------------------------------------------------------------

if __name__ == "__main__":
    # Small, deterministic shapes: batch=2, seq=8, hidden=32, num_labels=6.
    B, S, H, L = 2, 8, 32, 6
    key = jax.random.PRNGKey(0)
    k_hs, k_w, k_b, k_lab = jax.random.split(key, 4)

    # TODO(synk): the AutoModelForCausalLM backbone is not reproducible here;
    # its last-layer hidden states are simulated with deterministic bf16 noise.
    hidden_states = jax.random.normal(k_hs, (B, S, H),
                                      jnp.float32).astype(jnp.bfloat16)
    attention_mask = jnp.ones((B, S), jnp.int32)
    labels = jax.random.randint(k_lab, (B,), 0, L, dtype=jnp.int32)

    # Deterministic classifier parameters (nn.Linear(hidden_size, num_labels)).
    w = jax.random.normal(k_w, (L, H), jnp.float32) * (1.0 / jnp.sqrt(H))
    b = jax.random.normal(k_b, (L,), jnp.float32) * 0.01
    w_pad, b_pad = prepare_classifier_params(w, b, L)

    loss, logits = custom_model_head(hidden_states, attention_mask, labels,
                                     w_pad, b_pad, L)
    jax.block_until_ready((loss, logits))

    # Reference (same bf16 rounding of inputs/weights as the kernel's MXU path).
    cls_f32 = hidden_states[:, 0, :].astype(jnp.float32)
    w_bf = w.astype(jnp.bfloat16).astype(jnp.float32)
    ref_logits = cls_f32 @ w_bf.T + b
    ref_loss = jnp.mean(
        jax.nn.logsumexp(ref_logits, axis=-1)
        - jnp.take_along_axis(ref_logits, labels[:, None], axis=-1)[:, 0])
    assert jnp.allclose(logits, ref_logits, atol=1e-3, rtol=1e-3)
    assert jnp.allclose(loss, ref_loss, atol=1e-3, rtol=1e-3)

    # No-label path: loss must be None, logits unchanged (loss-free kernel).
    loss_none, logits2 = custom_model_head(hidden_states, attention_mask, None,
                                           w_pad, b_pad, L)
    jax.block_until_ready(logits2)
    assert loss_none is None
    assert jnp.allclose(logits2, ref_logits, atol=1e-3, rtol=1e-3)

    print("KERNEL_OK")
</pallas_src>

<mosaic_0001>
module attributes {stable_mosaic.version = 11 : i64} {
  func.func @clf_logits_loss_kernel(%arg0: i32, %arg1: memref<8x128xbf16, #tpu.memory_space<vmem>>, %arg2: memref<8x1xi32, #tpu.memory_space<vmem>>, %arg3: memref<128x128xbf16, #tpu.memory_space<vmem>>, %arg4: memref<1x128xf32, #tpu.memory_space<vmem>>, %arg5: memref<8x128xf32, #tpu.memory_space<vmem>>, %arg6: memref<1x8x128xf32, #tpu.memory_space<vmem>>) attributes {dimension_semantics = [#tpu.dimension_semantics<parallel>], iteration_bounds = array<i64: 1>, scalar_prefetch = 0 : i64, scratch_operands = 0 : i64, tpu.core_type = #tpu.core_type<tc>, window_params = [{transform_indices = @transform_0, window_bounds = array<i64: 8, 128>}, {transform_indices = @transform_1, window_bounds = array<i64: 8, 1>}, {pipeline_mode = #tpu.pipeline_mode<synchronous>, transform_indices = @transform_2, window_bounds = array<i64: 128, 128>}, {pipeline_mode = #tpu.pipeline_mode<synchronous>, transform_indices = @transform_3, window_bounds = array<i64: 1, 128>}, {transform_indices = @transform_4, window_bounds = array<i64: 8, 128>}, {transform_indices = @transform_5, window_bounds = array<i64: 1, 8, 128>}]} {
    %c0 = arith.constant 0 : index
    %c0_0 = arith.constant 0 : index
    %0 = vector.load %arg1[%c0, %c0_0] : memref<8x128xbf16, #tpu.memory_space<vmem>>, vector<8x128xbf16>
    %c0_1 = arith.constant 0 : index
    %c0_2 = arith.constant 0 : index
    %1 = vector.load %arg3[%c0_1, %c0_2] : memref<128x128xbf16, #tpu.memory_space<vmem>>, vector<128x128xbf16>
    %cst = arith.constant dense<0.000000e+00> : vector<8x128xf32>
    %2 = tpu.matmul %0, %1, %cst {dimension_numbers = #tpu.dot_dimension_numbers<[1], [0], [0], [1], [0, 0, 1, 1], [], []>} : vector<8x128xbf16>, vector<128x128xbf16>, vector<8x128xf32> -> vector<8x128xf32>
    %c0_3 = arith.constant 0 : index
    %c0_4 = arith.constant 0 : index
    %3 = vector.load %arg4[%c0_3, %c0_4] : memref<1x128xf32, #tpu.memory_space<vmem>>, vector<1x128xf32>
    %4 = vector.broadcast %3 : vector<1x128xf32> to vector<8x128xf32>
    %5 = arith.addf %2, %4 : vector<8x128xf32>
    %c0_5 = arith.constant 0 : index
    %c0_6 = arith.constant 0 : index
    %6 = vector.load %arg5[%c0_5, %c0_6] : memref<8x128xf32, #tpu.memory_space<vmem>>, vector<8x128xf32>
    tpu.vector_store %arg5[%c0_5, %c0_6], %5 {strides = array<i32>} : memref<8x128xf32, #tpu.memory_space<vmem>>, vector<8x128xf32>,
    %c0_7 = arith.constant 0 : index
    %c0_8 = arith.constant 0 : index
    %7 = vector.load %arg2[%c0_7, %c0_8] : memref<8x1xi32, #tpu.memory_space<vmem>>, vector<8x1xi32>
    %8 = tpu.iota {dimensions = array<i32: 0>} : vector<8x1xi32>
    %c8_i32 = arith.constant 8 : i32
    %9 = arith.muli %arg0, %c8_i32 : i32
    %10 = vector.broadcast %9 : i32 to vector<8x1xi32>
    %11 = arith.addi %8, %10 : vector<8x1xi32>
    %c8_i32_9 = arith.constant 8 : i32
    %12 = vector.broadcast %c8_i32_9 : i32 to vector<8x1xi32>
    %13 = arith.cmpi slt, %11, %12 : vector<8x1xi32>
    %c-100_i32 = arith.constant -100 : i32
    %14 = vector.broadcast %c-100_i32 : i32 to vector<8x1xi32>
    %15 = arith.cmpi ne, %7, %14 : vector<8x1xi32>
    %16 = arith.andi %13, %15 : vector<8x1xi1>
    %cst_10 = arith.constant dense<0xFF800000> : vector<8xf32>
    %17 = vector.multi_reduction <maximumf>, %5, %cst_10 [1] : vector<8x128xf32> to vector<8xf32>
    %18 = vector.shape_cast %17 : vector<8xf32> to vector<8x1xf32>
    %19 = vector.broadcast %18 : vector<8x1xf32> to vector<8x128xf32>
    %20 = arith.subf %5, %19 : vector<8x128xf32>
    %21 = math.exp %20 : vector<8x128xf32>
    %cst_11 = arith.constant dense<0.000000e+00> : vector<8xf32>
    %22 = vector.multi_reduction <add>, %21, %cst_11 [1] : vector<8x128xf32> to vector<8xf32>
    %23 = vector.shape_cast %22 : vector<8xf32> to vector<8x1xf32>
    %24 = math.log %23 : vector<8x1xf32>
    %25 = arith.addf %24, %18 : vector<8x1xf32>
    %26 = tpu.iota {dimensions = array<i32: 1>} : vector<8x128xi32>
    %27 = vector.broadcast %7 : vector<8x1xi32> to vector<8x128xi32>
    %28 = arith.cmpi eq, %26, %27 : vector<8x128xi32>
    %cst_12 = arith.constant 0.000000e+00 : f32
    %29 = vector.broadcast %cst_12 : f32 to vector<8x128xf32>
    %30 = arith.select %28, %5, %29 : vector<8x128xi1>, vector<8x128xf32>
    %cst_13 = arith.constant dense<0.000000e+00> : vector<8xf32>
    %31 = vector.multi_reduction <add>, %30, %cst_13 [1] : vector<8x128xf32> to vector<8xf32>
    %32 = vector.shape_cast %31 : vector<8xf32> to vector<8x1xf32>
    %33 = arith.subf %25, %32 : vector<8x1xf32>
    %cst_14 = arith.constant 0.000000e+00 : f32
    %34 = vector.broadcast %cst_14 : f32 to vector<8x1xf32>
    %35 = arith.select %16, %33, %34 : vector<8x1xi1>, vector<8x1xf32>
    %36 = vector.shape_cast %35 : vector<8x1xf32> to vector<1x8x1xf32>
    %cst_15 = arith.constant dense<0.000000e+00> : vector<1xf32>
    %37 = vector.multi_reduction <add>, %36, %cst_15 [1, 2] : vector<1x8x1xf32> to vector<1xf32>
    %38 = vector.shape_cast %37 : vector<1xf32> to vector<1x1x1xf32>
    %39 = vector.extract %38[0, 0, 0] : f32 from vector<1x1x1xf32>
    %cst_16 = arith.constant 1.000000e+00 : f32
    %cst_17 = arith.constant 0.000000e+00 : f32
    %40 = vector.broadcast %cst_16 : f32 to vector<8x1xf32>
    %41 = vector.broadcast %cst_17 : f32 to vector<8x1xf32>
    %42 = arith.select %16, %40, %41 : vector<8x1xi1>, vector<8x1xf32>
    %43 = vector.shape_cast %42 : vector<8x1xf32> to vector<1x8x1xf32>
    %cst_18 = arith.constant dense<0.000000e+00> : vector<1xf32>
    %44 = vector.multi_reduction <add>, %43, %cst_18 [1, 2] : vector<1x8x1xf32> to vector<1xf32>
    %45 = vector.shape_cast %44 : vector<1xf32> to vector<1x1x1xf32>
    %46 = vector.extract %45[0, 0, 0] : f32 from vector<1x1x1xf32>
    %47 = tpu.iota {dimensions = array<i32: 1>} : vector<1x128xi32>
    %c0_i32 = arith.constant 0 : i32
    %48 = vector.broadcast %c0_i32 : i32 to vector<1x128xi32>
    %49 = arith.cmpi eq, %47, %48 : vector<1x128xi32>
    %c1_i32 = arith.constant 1 : i32
    %50 = vector.broadcast %c1_i32 : i32 to vector<1x128xi32>
    %51 = arith.cmpi eq, %47, %50 : vector<1x128xi32>
    %cst_19 = arith.constant 0.000000e+00 : f32
    %52 = vector.broadcast %46 : f32 to vector<1x128xf32>
    %53 = vector.broadcast %cst_19 : f32 to vector<1x128xf32>
    %54 = arith.select %51, %52, %53 : vector<1x128xi1>, vector<1x128xf32>
    %55 = vector.broadcast %39 : f32 to vector<1x128xf32>
    %56 = arith.select %49, %55, %54 : vector<1x128xi1>, vector<1x128xf32>
    %c0_20 = arith.constant 0 : index
    %c0_21 = arith.constant 0 : index
    %c0_22 = arith.constant 0 : index
    %57 = vector.load %arg6[%c0_20, %c0_21, %c0_22] : memref<1x8x128xf32, #tpu.memory_space<vmem>>, vector<1x1x128xf32>
    %58 = vector.shape_cast %57 : vector<1x1x128xf32> to vector<1x128xf32>
    %59 = vector.shape_cast %56 : vector<1x128xf32> to vector<1x1x128xf32>
    tpu.vector_store %arg6[%c0_20, %c0_21, %c0_22], %59 {strides = array<i32>} : memref<1x8x128xf32, #tpu.memory_space<vmem>>, vector<1x1x128xf32>,
    return
  }
  func.func @transform_0(%arg0: i32) -> (i32, i32) {
    %c0_i32 = arith.constant 0 : i32
    %c0_i32_0 = arith.constant 0 : i32
    return %arg0, %c0_i32 : i32, i32
  }
  func.func @transform_1(%arg0: i32) -> (i32, i32) {
    %c0_i32 = arith.constant 0 : i32
    %c0_i32_0 = arith.constant 0 : i32
    return %arg0, %c0_i32 : i32, i32
  }
  func.func @transform_2(%arg0: i32) -> (i32, i32) {
    %c0_i32 = arith.constant 0 : i32
    %c0_i32_0 = arith.constant 0 : i32
    %c0_i32_1 = arith.constant 0 : i32
    return %c0_i32, %c0_i32_0 : i32, i32
  }
  func.func @transform_3(%arg0: i32) -> (i32, i32) {
    %c0_i32 = arith.constant 0 : i32
    %c0_i32_0 = arith.constant 0 : i32
    %c0_i32_1 = arith.constant 0 : i32
    return %c0_i32, %c0_i32_0 : i32, i32
  }
  func.func @transform_4(%arg0: i32) -> (i32, i32) {
    %c0_i32 = arith.constant 0 : i32
    %c0_i32_0 = arith.constant 0 : i32
    return %arg0, %c0_i32 : i32, i32
  }
  func.func @transform_5(%arg0: i32) -> (i32, i32, i32) {
    %c0_i32 = arith.constant 0 : i32
    %c0_i32_0 = arith.constant 0 : i32
    %c0_i32_1 = arith.constant 0 : i32
    return %arg0, %c0_i32, %c0_i32_0 : i32, i32, i32
  }
}

module attributes {stable_mosaic.version = 11 : i64} {
  func.func @clf_logits_loss_kernel(%arg0: i32, %arg1: memref<2x32xbf16, #tpu.memory_space<vmem>>, %arg2: memref<2x1xi32, #tpu.memory_space<vmem>>, %arg3: memref<32x128xbf16, #tpu.memory_space<vmem>>, %arg4: memref<1x128xf32, #tpu.memory_space<vmem>>, %arg5: memref<2x128xf32, #tpu.memory_space<vmem>>, %arg6: memref<1x8x128xf32, #tpu.memory_space<vmem>>) attributes {dimension_semantics = [#tpu.dimension_semantics<parallel>], iteration_bounds = array<i64: 1>, scalar_prefetch = 0 : i64, scratch_operands = 0 : i64, tpu.core_type = #tpu.core_type<tc>, window_params = [{transform_indices = @transform_0, window_bounds = array<i64: 2, 32>}, {transform_indices = @transform_1, window_bounds = array<i64: 2, 1>}, {pipeline_mode = #tpu.pipeline_mode<synchronous>, transform_indices = @transform_2, window_bounds = array<i64: 32, 128>}, {pipeline_mode = #tpu.pipeline_mode<synchronous>, transform_indices = @transform_3, window_bounds = array<i64: 1, 128>}, {transform_indices = @transform_4, window_bounds = array<i64: 2, 128>}, {transform_indices = @transform_5, window_bounds = array<i64: 1, 8, 128>}]} {
    %c0 = arith.constant 0 : index
    %c0_0 = arith.constant 0 : index
    %0 = vector.load %arg1[%c0, %c0_0] : memref<2x32xbf16, #tpu.memory_space<vmem>>, vector<2x32xbf16>
    %c0_1 = arith.constant 0 : index
    %c0_2 = arith.constant 0 : index
    %1 = vector.load %arg3[%c0_1, %c0_2] : memref<32x128xbf16, #tpu.memory_space<vmem>>, vector<32x128xbf16>
    %cst = arith.constant dense<0.000000e+00> : vector<2x128xf32>
    %2 = tpu.matmul %0, %1, %cst {dimension_numbers = #tpu.dot_dimension_numbers<[1], [0], [0], [1], [0, 0, 1, 1], [], []>} : vector<2x32xbf16>, vector<32x128xbf16>, vector<2x128xf32> -> vector<2x128xf32>
    %c0_3 = arith.constant 0 : index
    %c0_4 = arith.constant 0 : index
    %3 = vector.load %arg4[%c0_3, %c0_4] : memref<1x128xf32, #tpu.memory_space<vmem>>, vector<1x128xf32>
    %4 = vector.broadcast %3 : vector<1x128xf32> to vector<2x128xf32>
    %5 = arith.addf %2, %4 : vector<2x128xf32>
    %c0_5 = arith.constant 0 : index
    %c0_6 = arith.constant 0 : index
    %6 = vector.load %arg5[%c0_5, %c0_6] : memref<2x128xf32, #tpu.memory_space<vmem>>, vector<2x128xf32>
    tpu.vector_store %arg5[%c0_5, %c0_6], %5 {strides = array<i32>} : memref<2x128xf32, #tpu.memory_space<vmem>>, vector<2x128xf32>,
    %c0_7 = arith.constant 0 : index
    %c0_8 = arith.constant 0 : index
    %7 = vector.load %arg2[%c0_7, %c0_8] : memref<2x1xi32, #tpu.memory_space<vmem>>, vector<2x1xi32>
    %8 = tpu.iota {dimensions = array<i32: 0>} : vector<2x1xi32>
    %c2_i32 = arith.constant 2 : i32
    %9 = arith.muli %arg0, %c2_i32 : i32
    %10 = vector.broadcast %9 : i32 to vector<2x1xi32>
    %11 = arith.addi %8, %10 : vector<2x1xi32>
    %c2_i32_9 = arith.constant 2 : i32
    %12 = vector.broadcast %c2_i32_9 : i32 to vector<2x1xi32>
    %13 = arith.cmpi slt, %11, %12 : vector<2x1xi32>
    %c-100_i32 = arith.constant -100 : i32
    %14 = vector.broadcast %c-100_i32 : i32 to vector<2x1xi32>
    %15 = arith.cmpi ne, %7, %14 : vector<2x1xi32>
    %16 = arith.andi %13, %15 : vector<2x1xi1>
    %cst_10 = arith.constant dense<0xFF800000> : vector<2xf32>
    %17 = vector.multi_reduction <maximumf>, %5, %cst_10 [1] : vector<2x128xf32> to vector<2xf32>
    %18 = vector.shape_cast %17 : vector<2xf32> to vector<2x1xf32>
    %19 = vector.broadcast %18 : vector<2x1xf32> to vector<2x128xf32>
    %20 = arith.subf %5, %19 : vector<2x128xf32>
    %21 = math.exp %20 : vector<2x128xf32>
    %cst_11 = arith.constant dense<0.000000e+00> : vector<2xf32>
    %22 = vector.multi_reduction <add>, %21, %cst_11 [1] : vector<2x128xf32> to vector<2xf32>
    %23 = vector.shape_cast %22 : vector<2xf32> to vector<2x1xf32>
    %24 = math.log %23 : vector<2x1xf32>
    %25 = arith.addf %24, %18 : vector<2x1xf32>
    %26 = tpu.iota {dimensions = array<i32: 1>} : vector<2x128xi32>
    %27 = vector.broadcast %7 : vector<2x1xi32> to vector<2x128xi32>
    %28 = arith.cmpi eq, %26, %27 : vector<2x128xi32>
    %cst_12 = arith.constant 0.000000e+00 : f32
    %29 = vector.broadcast %cst_12 : f32 to vector<2x128xf32>
    %30 = arith.select %28, %5, %29 : vector<2x128xi1>, vector<2x128xf32>
    %cst_13 = arith.constant dense<0.000000e+00> : vector<2xf32>
    %31 = vector.multi_reduction <add>, %30, %cst_13 [1] : vector<2x128xf32> to vector<2xf32>
    %32 = vector.shape_cast %31 : vector<2xf32> to vector<2x1xf32>
    %33 = arith.subf %25, %32 : vector<2x1xf32>
    %cst_14 = arith.constant 0.000000e+00 : f32
    %34 = vector.broadcast %cst_14 : f32 to vector<2x1xf32>
    %35 = arith.select %16, %33, %34 : vector<2x1xi1>, vector<2x1xf32>
    %36 = vector.shape_cast %35 : vector<2x1xf32> to vector<1x2x1xf32>
    %cst_15 = arith.constant dense<0.000000e+00> : vector<1xf32>
    %37 = vector.multi_reduction <add>, %36, %cst_15 [1, 2] : vector<1x2x1xf32> to vector<1xf32>
    %38 = vector.shape_cast %37 : vector<1xf32> to vector<1x1x1xf32>
    %39 = vector.extract %38[0, 0, 0] : f32 from vector<1x1x1xf32>
    %cst_16 = arith.constant 1.000000e+00 : f32
    %cst_17 = arith.constant 0.000000e+00 : f32
    %40 = vector.broadcast %cst_16 : f32 to vector<2x1xf32>
    %41 = vector.broadcast %cst_17 : f32 to vector<2x1xf32>
    %42 = arith.select %16, %40, %41 : vector<2x1xi1>, vector<2x1xf32>
    %43 = vector.shape_cast %42 : vector<2x1xf32> to vector<1x2x1xf32>
    %cst_18 = arith.constant dense<0.000000e+00> : vector<1xf32>
    %44 = vector.multi_reduction <add>, %43, %cst_18 [1, 2] : vector<1x2x1xf32> to vector<1xf32>
    %45 = vector.shape_cast %44 : vector<1xf32> to vector<1x1x1xf32>
    %46 = vector.extract %45[0, 0, 0] : f32 from vector<1x1x1xf32>
    %47 = tpu.iota {dimensions = array<i32: 1>} : vector<1x128xi32>
    %c0_i32 = arith.constant 0 : i32
    %48 = vector.broadcast %c0_i32 : i32 to vector<1x128xi32>
    %49 = arith.cmpi eq, %47, %48 : vector<1x128xi32>
    %c1_i32 = arith.constant 1 : i32
    %50 = vector.broadcast %c1_i32 : i32 to vector<1x128xi32>
    %51 = arith.cmpi eq, %47, %50 : vector<1x128xi32>
    %cst_19 = arith.constant 0.000000e+00 : f32
    %52 = vector.broadcast %46 : f32 to vector<1x128xf32>
    %53 = vector.broadcast %cst_19 : f32 to vector<1x128xf32>
    %54 = arith.select %51, %52, %53 : vector<1x128xi1>, vector<1x128xf32>
    %55 = vector.broadcast %39 : f32 to vector<1x128xf32>
    %56 = arith.select %49, %55, %54 : vector<1x128xi1>, vector<1x128xf32>
    %c0_20 = arith.constant 0 : index
    %c0_21 = arith.constant 0 : index
    %c0_22 = arith.constant 0 : index
    %57 = vector.load %arg6[%c0_20, %c0_21, %c0_22] : memref<1x8x128xf32, #tpu.memory_space<vmem>>, vector<1x1x128xf32>
    %58 = vector.shape_cast %57 : vector<1x1x128xf32> to vector<1x128xf32>
    %59 = vector.shape_cast %56 : vector<1x128xf32> to vector<1x1x128xf32>
    tpu.vector_store %arg6[%c0_20, %c0_21, %c0_22], %59 {strides = array<i32>} : memref<1x8x128xf32, #tpu.memory_space<vmem>>, vector<1x1x128xf32>,
    return
  }
  func.func @transform_0(%arg0: i32) -> (i32, i32) {
    %c0_i32 = arith.constant 0 : i32
    %c0_i32_0 = arith.constant 0 : i32
    return %arg0, %c0_i32 : i32, i32
  }
  func.func @transform_1(%arg0: i32) -> (i32, i32) {
    %c0_i32 = arith.constant 0 : i32
    %c0_i32_0 = arith.constant 0 : i32
    return %arg0, %c0_i32 : i32, i32
  }
  func.func @transform_2(%arg0: i32) -> (i32, i32) {
    %c0_i32 = arith.constant 0 : i32
    %c0_i32_0 = arith.constant 0 : i32
    %c0_i32_1 = arith.constant 0 : i32
    return %c0_i32, %c0_i32_0 : i32, i32
  }
  func.func @transform_3(%arg0: i32) -> (i32, i32) {
    %c0_i32 = arith.constant 0 : i32
    %c0_i32_0 = arith.constant 0 : i32
    %c0_i32_1 = arith.constant 0 : i32
    return %c0_i32, %c0_i32_0 : i32, i32
  }
  func.func @transform_4(%arg0: i32) -> (i32, i32) {
    %c0_i32 = arith.constant 0 : i32
    %c0_i32_0 = arith.constant 0 : i32
    return %arg0, %c0_i32 : i32, i32
  }
  func.func @transform_5(%arg0: i32) -> (i32, i32, i32) {
    %c0_i32 = arith.constant 0 : i32
    %c0_i32_0 = arith.constant 0 : i32
    %c0_i32_1 = arith.constant 0 : i32
    return %arg0, %c0_i32, %c0_i32_0 : i32, i32, i32
  }
}

</mosaic_0001>

<llo_original>
// kernel: tpu_custom_call.1
$region0: #{tpu_custom_call.1}
  #allocation0 [shape = 'u32[]', space=smem, size = 0x4, offset = 0x4, fixed_abs, tag = 'smem constant byte address 0x4 - core index']
  #allocation1 [shape = 'u32[144,128]{1,0:T(1,128)}', space=vmem, size = 0x12000, scoped, tag = 'internal scratch']
  %s0 = inlined_call_operand.vmem [shape: bf16[8,128], index: 0, kind: input, shape index: {}]
  %s1 = inlined_call_operand.vmem [shape: s32[8,1], index: 1, kind: input, shape index: {}]
  %s2 = inlined_call_operand.hbm [shape: bf16[128,128], index: 2, kind: input, shape index: {}]
  %s3 = inlined_call_operand.vmem [shape: f32[1,128], index: 3, kind: input, shape index: {}]
  %s4 = inlined_call_operand.hbm [shape: f32[8,128], index: 4, kind: output, shape index: {0}]
  %s5 = inlined_call_operand.hbm [shape: f32[1,8,128], index: 5, kind: output, shape index: {1}]
  %6 = xla_tuple %s4, %s5
  %s7 = sld [smem:[#allocation0]]
  $region38: #{tpu_custom_call.1} parent=0
    _
  %s9 = ssub.s32 1, %s7
  %s10 = scalar_select 0, %s9, %s7
  $region1: #{tpu_custom_call.1} parent=0
    #allocation2 [shape = 'u8[32768]{0}', space=vmem, size = 0x8000, scoped, tag = 'input window, operand 2, single buffered']
    #allocation3 [shape = 's32[1]{0}', space=sflag, size = 0x4, scoped, tag = 'scoped memory for tpu_custom_call.1']
    #allocation4 [shape = 's32[1]{0}', space=sflag, size = 0x4, scoped, tag = 'scoped memory for tpu_custom_call.1']
    #allocation5 [shape = 'u8[4096]{0}', space=vmem, size = 0x1000, scoped, tag = 'output window, operand 0, single buffered']
    #allocation6 [shape = 'u8[4096]{0}', space=vmem, size = 0x1000, scoped, tag = 'output window, operand 1, single buffered']
    #allocation7 [shape = 's32[1]{0}', space=sflag, size = 0x4, scoped, tag = 'scoped memory for tpu_custom_call.1']
    %11 = vsyncpa [#allocation3], 0
    %12 = vsyncpa [#allocation4], 0
    %13 = vsyncpa [#allocation7], 0
    // Predicated region
    $region2: #{tpu_custom_call.1} parent=1 // pred_check
      _
    $region3: #{tpu_custom_call.1} parent=1 // pred_check_branch
      %15 = sbr.rel (0) target = $region5
    $region4: #{tpu_custom_call.1} parent=1 // pred_region
      _
    $region5: #{tpu_custom_call.1} parent=1 // pred_fallthru
      _
    // Predicated region
    $region6: #{tpu_custom_call.1} parent=1 // pred_check
      _
    $region7: #{tpu_custom_call.1} parent=1 // pred_check_branch
      %17 = sbr.rel (0) target = $region9
    $region8: #{tpu_custom_call.1} parent=1 // pred_region
      _
    $region9: #{tpu_custom_call.1} parent=1 // pred_fallthru
      _
    // Predicated region
    $region10: #{tpu_custom_call.1} parent=1 // pred_check
      _
    $region11: #{tpu_custom_call.1} parent=1 // pred_check_branch
      %19 = sbr.rel (0) target = $region13
    $region12: #{tpu_custom_call.1} parent=1 // pred_region
      %s21 = ssub.s32 1024, 1024
      %22 = vsyncadd [#allocation3], %s21
      %s23 = sshll.u32 [#allocation2], 4
      %s24 = int_to_ptr.vmem [resolvable:$true] %s23
      %29 = dma.hbm_to_vmem [thread:$0]  %s2, 1024, %s24, [#allocation3], 64, 64, 4
    $region13: #{tpu_custom_call.1} parent=1 // pred_fallthru
      _
    // Predicated region
    $region14: #{tpu_custom_call.1} parent=1 // pred_check
      _
    $region15: #{tpu_custom_call.1} parent=1 // pred_check_branch
      %31 = sbr.rel (0) target = $region17
    $region16: #{tpu_custom_call.1} parent=1 // pred_region
      _
    $region17: #{tpu_custom_call.1} parent=1 // pred_fallthru
      _
    // Predicated region
    $region18: #{tpu_custom_call.1} parent=1 // pred_check
      _
    $region19: #{tpu_custom_call.1} parent=1 // pred_check_branch
      %33 = sbr.rel (0) target = $region21
    $region20: #{tpu_custom_call.1} parent=1 // pred_region
      %34 = dma.done [#allocation3], 1024
    $region21: #{tpu_custom_call.1} parent=1 // pred_fallthru
      _
    %v36 = vld [vmem:[%s0] sm:$0xf]
    %v37 = vld [vmem:[#allocation2] sm:$0xf]
    %v38 = vld [vmem:[#allocation2 + $0x4] sm:$0xf]
    %v39 = vld [vmem:[#allocation2 + $0x8] sm:$0xf]
    %v40 = vld [vmem:[#allocation2 + $0xc] sm:$0xf]
    %v41 = vld [vmem:[#allocation2 + $0x10] sm:$0xf]
    %v42 = vld [vmem:[#allocation2 + $0x14] sm:$0xf]
    %v43 = vld [vmem:[#allocation2 + $0x18] sm:$0xf]
    %v44 = vld [vmem:[#allocation2 + $0x1c] sm:$0xf]
    %v45 = vld [vmem:[#allocation2 + $0x20] sm:$0xf]
    %v46 = vld [vmem:[#allocation2 + $0x24] sm:$0xf]
    %v47 = vld [vmem:[#allocation2 + $0x28] sm:$0xf]
    %v48 = vld [vmem:[#allocation2 + $0x2c] sm:$0xf]
    %v49 = vld [vmem:[#allocation2 + $0x30] sm:$0xf]
    %v50 = vld [vmem:[#allocation2 + $0x34] sm:$0xf]
    %v51 = vld [vmem:[#allocation2 + $0x38] sm:$0xf]
    %v52 = vld [vmem:[#allocation2 + $0x3c] sm:$0xf]
    %v53 = vld [vmem:[%s3] sm:$0x1]
    %v55 = vlaneseq
    %v56 = vshrl.u32 %v55, 7
    %v57 = vsub.s32 0, %v56
    %v58 = vrot.slane %v53, %v57
    %v76 = vunpack.c.l.b16 %v37
    %v77 = vunpack.c.l.b16 %v38
    %v78 = vunpack.c.l.b16 %v39
    %v79 = vunpack.c.l.b16 %v40
    %v80 = vunpack.c.l.b16 %v41
    %v81 = vunpack.c.l.b16 %v42
    %v82 = vunpack.c.l.b16 %v43
    %v83 = vunpack.c.l.b16 %v44
    %v84 = vunpack.c.l.b16 %v45
    %v85 = vunpack.c.l.b16 %v46
    %v86 = vunpack.c.l.b16 %v47
    %v87 = vunpack.c.l.b16 %v48
    %v88 = vunpack.c.l.b16 %v49
    %v89 = vunpack.c.l.b16 %v50
    %v90 = vunpack.c.l.b16 %v51
    %v91 = vunpack.c.l.b16 %v52
    %v92 = vpack.c.b16 %v77, %v76
    %v93 = vpack.c.b16 %v79, %v78
    %v94 = vpack.c.b16 %v81, %v80
    %v95 = vpack.c.b16 %v83, %v82
    %v96 = vpack.c.b16 %v85, %v84
    %v97 = vpack.c.b16 %v87, %v86
    %v98 = vpack.c.b16 %v89, %v88
    %v99 = vpack.c.b16 %v91, %v90
    %108 = vmatprep.subr.bf16.mxu0 0
    %109 = vmatpush1.bf16.msra.mxu0 %v92
    %110 = vmatprep.subr.bf16.mxu0 0
    %111 = vmatpush1.bf16.msra.mxu0 %v93
    %112 = vmatprep.subr.bf16.mxu0 0
    %113 = vmatpush1.bf16.msra.mxu0 %v94
    %114 = vmatprep.subr.bf16.mxu0 0
    %115 = vmatpush1.bf16.msra.mxu0 %v95
    %116 = vmatprep.subr.bf16.mxu0 0
    %117 = vmatpush1.bf16.msra.mxu0 %v96
    %118 = vmatprep.subr.bf16.mxu0 0
    %119 = vmatpush1.bf16.msra.mxu0 %v97
    %120 = vmatprep.subr.bf16.mxu0 0
    %121 = vmatpush1.bf16.msra.mxu0 %v98
    %122 = vmatprep.subr.bf16.mxu0 0
    %123 = vmatpush1.bf16.msra.mxu0 %v99
    %124 = vmatprep.subr.bf16.mxu0 0
    %125 = vmatpush1.bf16.msra.mxu0 0
    %126 = vmatprep.subr.bf16.mxu0 0
    %127 = vmatpush1.bf16.msra.mxu0 0
    %128 = vmatprep.subr.bf16.mxu0 0
    %129 = vmatpush1.bf16.msra.mxu0 0
    %130 = vmatprep.subr.bf16.mxu0 0
    %131 = vmatpush1.bf16.msra.mxu0 0
    %132 = vmatprep.subr.bf16.mxu0 0
    %133 = vmatpush1.bf16.msra.mxu0 0
    %134 = vmatprep.subr.bf16.mxu0 0
    %135 = vmatpush1.bf16.msra.mxu0 0
    %136 = vmatprep.subr.bf16.mxu0 0
    %137 = vmatpush1.bf16.msra.mxu0 0
    %138 = vmatprep.subr.bf16.mxu0 0
    %139 = vmatpush1.bf16.msra.mxu0 0
    %140 = vmatprep.mubr.bf16.mxu0 0
    %141 = vmatmul.mubr.bf16.gmra.mrb[0].mxu0 %v36
    %v142 = vpop.f32.mrb[0].mxu0
    %v143 = vadd.f32 %v58, %v142
    %v144 = vpop.f32.mrb[0].mxu0
    %v145 = vpop.f32.mrb[0].mxu0
    %v146 = vpop.f32.mrb[0].mxu0
    %147 = vdwg.mxu0
    %148 = vst [vmem:[#allocation5] sm:$0xff] %v143
    %v149 = vld [vmem:[%s1] sm:$0xff]
    %v150 = vlaneseq
    %v151 = vshrl.u32 %v150, 7
    %s152 = smul.u32 0, 8
    %v153 = vstv %s152
    %v154 = vadd.s32 %v151, %v153
    %vm155 = vcmp.lt.s32.totalorder %v154, 8
    %vm156 = vcmp.ne.s32.totalorder %v149, 4294967196
    %vm157 = vmand %vm155, %vm156
    %158 = vmax.xlane.f32.xlu0 %v143
    %v159 = vpop.xlane.xlu0 %158
    %v160 = vsub.f32 %v143, %v159
    %v161 = vmul.f32 %v160, 1.442695
    %v162 = vpow.pop %v161
    %163 = vadd.xlane.f32.xlu0 %v162
    %v164 = vpop.xlane.xlu0 %163
    %v165 = vlog2.pop %v164
    %v166 = vmul.f32 %v165, 0.6931472
    %v167 = vadd.f32 %v166, %v159
    %v168 = vlaneseq
    %v169 = vand.u32 %v168, 127
    %170 = vset.pattern.permute.xlu0 0
    %171 = vperm.xlu0 %170, %v149
    %v172 = vpop.permute.xlu0 %171
    %vm173 = vcmp.eq.s32.totalorder %v169, %v172
    %v174 = vsel %vm173, %v143, 0.0
    %175 = vadd.xlane.f32.xlu0 %v174
    %v176 = vpop.xlane.xlu0 %175
    %v177 = vsub.f32 %v167, %v176
    %v178 = vsel %vm157, %v177, 0.0
    %vm179 = vcmask 7168
    %v180 = vsel %vm179, %v178, 0.0
    %181 = vadd.xlane.f32.xlu0 %v180
    %v182 = vpop.xlane.xlu0 %181
    %v183 = vrot.slane %v182, 4
    %v184 = vadd.f32 %v182, %v183
    %v185 = vrot.slane %v184, 2
    %v186 = vadd.f32 %v184, %v185
    %v187 = vrot.slane %v186, 1
    %v188 = vadd.f32 %v186, %v187
    %s189 = vtos %v188
    %v190 = vsel %vm157, 1.0, 0.0
    %v191 = vsel %vm179, %v190, 0.0
    %192 = vadd.xlane.f32.xlu0 %v191
    %v193 = vpop.xlane.xlu0 %192
    %v194 = vrot.slane %v193, 4
    %v195 = vadd.f32 %v193, %v194
    %v196 = vrot.slane %v195, 2
    %v197 = vadd.f32 %v195, %v196
    %v198 = vrot.slane %v197, 1
    %v199 = vadd.f32 %v197, %v198
    %s200 = vtos %v199
    %vm201 = vcmp.eq.s32.totalorder %v169, 0
    %vm202 = vcmp.eq.s32.totalorder %v169, 1
    %v203 = vstv %s200
    %v204 = vsel %vm202, %v203, 0.0
    %v205 = vstv %s189
    %v206 = vsel %vm201, %v205, %v204
    %207 = vst [vmem:[#allocation6] sm:$0x1] %v206
    // Predicated region
    $region22: #{tpu_custom_call.1} parent=1 // pred_check
      _
    $region23: #{tpu_custom_call.1} parent=1 // pred_check_branch
      %209 = sbr.rel (0) target = $region25
    $region24: #{tpu_custom_call.1} parent=1 // pred_region
      %s211 = ssub.s32 128, 128
      %212 = vsyncadd [#allocation4], %s211
      %s214 = sshll.u32 [#allocation5], 4
      %s215 = int_to_ptr.vmem [resolvable:$true] %s214
      %217 = dma.vmem_to_hbm [thread:$0]  %s215, 128, %s4, [#allocation4]
    $region25: #{tpu_custom_call.1} parent=1 // pred_fallthru
      _
    // Predicated region
    $region26: #{tpu_custom_call.1} parent=1 // pred_check
      _
    $region27: #{tpu_custom_call.1} parent=1 // pred_check_branch
      %219 = sbr.rel (0) target = $region29
    $region28: #{tpu_custom_call.1} parent=1 // pred_region
      %s221 = ssub.s32 128, 128
      %222 = vsyncadd [#allocation7], %s221
      %s224 = sshll.u32 [#allocation6], 4
      %s225 = int_to_ptr.vmem [resolvable:$true] %s224
      %227 = dma.vmem_to_hbm [thread:$0]  %s225, 128, %s5, [#allocation7]
    $region29: #{tpu_custom_call.1} parent=1 // pred_fallthru
      _
    // Predicated region
    $region30: #{tpu_custom_call.1} parent=1 // pred_check
      _
    $region31: #{tpu_custom_call.1} parent=1 // pred_check_branch
      %229 = sbr.rel (0) target = $region33
    $region32: #{tpu_custom_call.1} parent=1 // pred_region
      %230 = dma.done [#allocation4], 128
    $region33: #{tpu_custom_call.1} parent=1 // pred_fallthru
      _
    // Predicated region
    $region34: #{tpu_custom_call.1} parent=1 // pred_check
      _
    $region35: #{tpu_custom_call.1} parent=1 // pred_check_branch
      %232 = sbr.rel (0) target = $region37
    $region36: #{tpu_custom_call.1} parent=1 // pred_region
      %233 = dma.done [#allocation7], 128
    $region37: #{tpu_custom_call.1} parent=1 // pred_fallthru
      _
    %234 = vsyncpa [#allocation3], 1
    %235 = vsyncpa [#allocation4], 1
    %236 = vsyncpa [#allocation7], 1

// kernel: tpu_custom_call.1
$region0: #{tpu_custom_call.1}
  #allocation0 [shape = 'u32[]', space=smem, size = 0x4, offset = 0x4, fixed_abs, tag = 'smem constant byte address 0x4 - core index']
  #allocation1 [shape = 'u32[144,128]{1,0:T(1,128)}', space=vmem, size = 0x12000, scoped, tag = 'internal scratch']
  %s0 = inlined_call_operand.vmem [shape: bf16[2,32], index: 0, kind: input, shape index: {}]
  %s1 = inlined_call_operand.vmem [shape: s32[2,1], index: 1, kind: input, shape index: {}]
  %s2 = inlined_call_operand.hbm [shape: bf16[32,128], index: 2, kind: input, shape index: {}]
  %s3 = inlined_call_operand.vmem [shape: f32[1,128], index: 3, kind: input, shape index: {}]
  %s4 = inlined_call_operand.hbm [shape: f32[2,128], index: 4, kind: output, shape index: {0}]
  %s5 = inlined_call_operand.hbm [shape: f32[1,8,128], index: 5, kind: output, shape index: {1}]
  %6 = xla_tuple %s4, %s5
  %s7 = sld [smem:[#allocation0]]
  $region38: #{tpu_custom_call.1} parent=0
    _
  %s9 = ssub.s32 1, %s7
  %s10 = scalar_select 0, %s9, %s7
  $region1: #{tpu_custom_call.1} parent=0
    #allocation2 [shape = 'u8[8192]{0}', space=vmem, size = 0x2000, scoped, tag = 'input window, operand 2, single buffered']
    #allocation3 [shape = 's32[1]{0}', space=sflag, size = 0x4, scoped, tag = 'scoped memory for tpu_custom_call.1']
    #allocation4 [shape = 's32[1]{0}', space=sflag, size = 0x4, scoped, tag = 'scoped memory for tpu_custom_call.1']
    #allocation5 [shape = 'u8[1024]{0}', space=vmem, size = 0x400, scoped, tag = 'output window, operand 0, single buffered']
    #allocation6 [shape = 'u8[4096]{0}', space=vmem, size = 0x1000, scoped, tag = 'output window, operand 1, single buffered']
    #allocation7 [shape = 's32[1]{0}', space=sflag, size = 0x4, scoped, tag = 'scoped memory for tpu_custom_call.1']
    %11 = vsyncpa [#allocation3], 0
    %12 = vsyncpa [#allocation4], 0
    %13 = vsyncpa [#allocation7], 0
    // Predicated region
    $region2: #{tpu_custom_call.1} parent=1 // pred_check
      _
    $region3: #{tpu_custom_call.1} parent=1 // pred_check_branch
      %15 = sbr.rel (0) target = $region5
    $region4: #{tpu_custom_call.1} parent=1 // pred_region
      _
    $region5: #{tpu_custom_call.1} parent=1 // pred_fallthru
      _
    // Predicated region
    $region6: #{tpu_custom_call.1} parent=1 // pred_check
      _
    $region7: #{tpu_custom_call.1} parent=1 // pred_check_branch
      %17 = sbr.rel (0) target = $region9
    $region8: #{tpu_custom_call.1} parent=1 // pred_region
      _
    $region9: #{tpu_custom_call.1} parent=1 // pred_fallthru
      _
    // Predicated region
    $region10: #{tpu_custom_call.1} parent=1 // pred_check
      _
    $region11: #{tpu_custom_call.1} parent=1 // pred_check_branch
      %19 = sbr.rel (0) target = $region13
    $region12: #{tpu_custom_call.1} parent=1 // pred_region
      %s21 = ssub.s32 256, 256
      %22 = vsyncadd [#allocation3], %s21
      %s23 = sshll.u32 [#allocation2], 4
      %s24 = int_to_ptr.vmem [resolvable:$true] %s23
      %29 = dma.hbm_to_vmem [thread:$0]  %s2, 256, %s24, [#allocation3], 64, 64, 4
    $region13: #{tpu_custom_call.1} parent=1 // pred_fallthru
      _
    // Predicated region
    $region14: #{tpu_custom_call.1} parent=1 // pred_check
      _
    $region15: #{tpu_custom_call.1} parent=1 // pred_check_branch
      %31 = sbr.rel (0) target = $region17
    $region16: #{tpu_custom_call.1} parent=1 // pred_region
      _
    $region17: #{tpu_custom_call.1} parent=1 // pred_fallthru
      _
    // Predicated region
    $region18: #{tpu_custom_call.1} parent=1 // pred_check
      _
    $region19: #{tpu_custom_call.1} parent=1 // pred_check_branch
      %33 = sbr.rel (0) target = $region21
    $region20: #{tpu_custom_call.1} parent=1 // pred_region
      %34 = dma.done [#allocation3], 256
    $region21: #{tpu_custom_call.1} parent=1 // pred_fallthru
      _
    %v36 = vld [vmem:[%s0] sm:$0x1]
    %v37 = vld [vmem:[#allocation2] sm:$0xf]
    %v38 = vld [vmem:[#allocation2 + $0x4] sm:$0xf]
    %v39 = vld [vmem:[#allocation2 + $0x8] sm:$0xf]
    %v40 = vld [vmem:[#allocation2 + $0xc] sm:$0xf]
    %v41 = vld [vmem:[%s3] sm:$0x1]
    %v43 = vlaneseq
    %v44 = vshrl.u32 %v43, 7
    %v45 = vsub.s32 0, %v44
    %v46 = vrot.slane %v41, %v45
    %v52 = vunpack.c.l.b16 %v37
    %v53 = vunpack.c.l.b16 %v38
    %v54 = vunpack.c.l.b16 %v39
    %v55 = vunpack.c.l.b16 %v40
    %v56 = vpack.c.b16 %v53, %v52
    %v57 = vpack.c.b16 %v55, %v54
    %vm60 = vcmask 261120
    %v62 = vsel %vm60, %v36, 0
    %64 = vmatprep.subr.bf16.mxu0 0
    %65 = vmatpush1.bf16.msra.mxu0 %v56
    %66 = vmatprep.subr.bf16.mxu0 0
    %67 = vmatpush1.bf16.msra.mxu0 %v57
    %68 = vmatprep.subr.bf16.mxu0 0
    %69 = vmatpush1.bf16.msra.mxu0 0
    %70 = vmatprep.subr.bf16.mxu0 0
    %71 = vmatpush1.bf16.msra.mxu0 0
    %72 = vmatprep.subr.bf16.mxu0 0
    %73 = vmatpush1.bf16.msra.mxu0 0
    %74 = vmatprep.subr.bf16.mxu0 0
    %75 = vmatpush1.bf16.msra.mxu0 0
    %76 = vmatprep.subr.bf16.mxu0 0
    %77 = vmatpush1.bf16.msra.mxu0 0
    %78 = vmatprep.subr.bf16.mxu0 0
    %79 = vmatpush1.bf16.msra.mxu0 0
    %80 = vmatprep.subr.bf16.mxu0 0
    %81 = vmatpush1.bf16.msra.mxu0 0
    %82 = vmatprep.subr.bf16.mxu0 0
    %83 = vmatpush1.bf16.msra.mxu0 0
    %84 = vmatprep.subr.bf16.mxu0 0
    %85 = vmatpush1.bf16.msra.mxu0 0
    %86 = vmatprep.subr.bf16.mxu0 0
    %87 = vmatpush1.bf16.msra.mxu0 0
    %88 = vmatprep.subr.bf16.mxu0 0
    %89 = vmatpush1.bf16.msra.mxu0 0
    %90 = vmatprep.subr.bf16.mxu0 0
    %91 = vmatpush1.bf16.msra.mxu0 0
    %92 = vmatprep.subr.bf16.mxu0 0
    %93 = vmatpush1.bf16.msra.mxu0 0
    %94 = vmatprep.subr.bf16.mxu0 0
    %95 = vmatpush1.bf16.msra.mxu0 0
    %96 = vmatprep.mubr.bf16.mxu0 0
    %97 = vmatmul.mubr.bf16.gmra.mrb[0].mxu0 %v62
    %v98 = vpop.f32.mrb[0].mxu0
    %v99 = vadd.f32 %v46, %v98
    %v100 = vpop.f32.mrb[0].mxu0
    %v101 = vpop.f32.mrb[0].mxu0
    %v102 = vpop.f32.mrb[0].mxu0
    %103 = vdwg.mxu0
    %104 = vst [vmem:[#allocation5] sm:$0x3] %v99
    %v105 = vld [vmem:[%s1] sm:$0x3]
    %v106 = vlaneseq
    %v107 = vshrl.u32 %v106, 7
    %s108 = smul.u32 0, 2
    %v109 = vstv %s108
    %v110 = vadd.s32 %v107, %v109
    %vm111 = vcmp.lt.s32.totalorder %v110, 2
    %vm112 = vcmp.ne.s32.totalorder %v105, 4294967196
    %vm113 = vmand %vm111, %vm112
    %vm114 = vcmask 1041408
    %v115 = vsel %vm114, %v99, -inf
    %116 = vmax.xlane.f32.xlu0 %v115
    %v117 = vpop.xlane.xlu0 %116
    %v118 = vsub.f32 %v99, %v117
    %v119 = vmul.f32 %v118, 1.442695
    %v120 = vpow.pop %v119
    %v121 = vsel %vm114, %v120, 0.0
    %122 = vadd.xlane.f32.xlu0 %v121
    %v123 = vpop.xlane.xlu0 %122
    %v124 = vlog2.pop %v123
    %v125 = vmul.f32 %v124, 0.6931472
    %v126 = vadd.f32 %v125, %v117
    %v127 = vlaneseq
    %v128 = vand.u32 %v127, 127
    %129 = vset.pattern.permute.xlu0 0
    %130 = vperm.xlu0 %129, %v105
    %v131 = vpop.permute.xlu0 %130
    %vm132 = vcmp.eq.s32.totalorder %v128, %v131
    %v133 = vsel %vm132, %v99, 0.0
    %v134 = vsel %vm114, %v133, 0.0
    %135 = vadd.xlane.f32.xlu0 %v134
    %v136 = vpop.xlane.xlu0 %135
    %v137 = vsub.f32 %v126, %v136
    %v138 = vsel %vm113, %v137, 0.0
    %vm139 = vcmask 1024
    %v140 = vsel %vm139, %v138, 0.0
    %141 = vadd.xlane.f32.xlu0 %v140
    %v142 = vpop.xlane.xlu0 %141
    %v143 = vrot.slane %v142, 4
    %v144 = vadd.f32 %v142, %v143
    %v145 = vrot.slane %v144, 2
    %v146 = vadd.f32 %v144, %v145
    %v147 = vrot.slane %v146, 1
    %v148 = vadd.f32 %v146, %v147
    %s149 = vtos %v148
    %v150 = vsel %vm113, 1.0, 0.0
    %v151 = vsel %vm139, %v150, 0.0
    %152 = vadd.xlane.f32.xlu0 %v151
    %v153 = vpop.xlane.xlu0 %152
    %v154 = vrot.slane %v153, 4
    %v155 = vadd.f32 %v153, %v154
    %v156 = vrot.slane %v155, 2
    %v157 = vadd.f32 %v155, %v156
    %v158 = vrot.slane %v157, 1
    %v159 = vadd.f32 %v157, %v158
    %s160 = vtos %v159
    %vm161 = vcmp.eq.s32.totalorder %v128, 0
    %vm162 = vcmp.eq.s32.totalorder %v128, 1
    %v163 = vstv %s160
    %v164 = vsel %vm162, %v163, 0.0
    %v165 = vstv %s149
    %v166 = vsel %vm161, %v165, %v164
    %167 = vst [vmem:[#allocation6] sm:$0x1] %v166
    // Predicated region
    $region22: #{tpu_custom_call.1} parent=1 // pred_check
      _
    $region23: #{tpu_custom_call.1} parent=1 // pred_check_branch
      %169 = sbr.rel (0) target = $region25
    $region24: #{tpu_custom_call.1} parent=1 // pred_region
      %s171 = ssub.s32 32, 32
      %172 = vsyncadd [#allocation4], %s171
      %s174 = sshll.u32 [#allocation5], 4
      %s175 = int_to_ptr.vmem [resolvable:$true] %s174
      %177 = dma.vmem_to_hbm [thread:$0]  %s175, 32, %s4, [#allocation4]
    $region25: #{tpu_custom_call.1} parent=1 // pred_fallthru
      _
    // Predicated region
    $region26: #{tpu_custom_call.1} parent=1 // pred_check
      _
    $region27: #{tpu_custom_call.1} parent=1 // pred_check_branch
      %179 = sbr.rel (0) target = $region29
    $region28: #{tpu_custom_call.1} parent=1 // pred_region
      %s181 = ssub.s32 128, 128
      %182 = vsyncadd [#allocation7], %s181
      %s184 = sshll.u32 [#allocation6], 4
      %s185 = int_to_ptr.vmem [resolvable:$true] %s184
      %187 = dma.vmem_to_hbm [thread:$0]  %s185, 128, %s5, [#allocation7]
    $region29: #{tpu_custom_call.1} parent=1 // pred_fallthru
      _
    // Predicated region
    $region30: #{tpu_custom_call.1} parent=1 // pred_check
      _
    $region31: #{tpu_custom_call.1} parent=1 // pred_check_branch
      %189 = sbr.rel (0) target = $region33
    $region32: #{tpu_custom_call.1} parent=1 // pred_region
      %190 = dma.done [#allocation4], 32
    $region33: #{tpu_custom_call.1} parent=1 // pred_fallthru
      _
    // Predicated region
    $region34: #{tpu_custom_call.1} parent=1 // pred_check
      _
    $region35: #{tpu_custom_call.1} parent=1 // pred_check_branch
      %192 = sbr.rel (0) target = $region37
    $region36: #{tpu_custom_call.1} parent=1 // pred_region
      %193 = dma.done [#allocation7], 128
    $region37: #{tpu_custom_call.1} parent=1 // pred_fallthru
      _
    %194 = vsyncpa [#allocation3], 1
    %195 = vsyncpa [#allocation4], 1
    %196 = vsyncpa [#allocation7], 1

</llo_original>
